<compile_context>
chip_gen: v7x
topology: tpu7x:2x2x1
jax: 0.10.0
libtpu: 0.0.40
codegen_flags: <defaults>
</compile_context>

<pallas_src>
import functools
import math
import random

import jax
import jax.numpy as jnp
from jax.experimental import pallas as pl
from jax.experimental.pallas import tpu as pltpu


# ----------------------------------------------------------------------------
# Synthetic transform definitions (deterministic "parameters" in-script).
# Each is a purely elementwise op, matching typical tensor augmentations.
# ----------------------------------------------------------------------------
TRANSFORM_DEFS = (
    ("brightness", {"shift": 0.1}),            # x + shift
    ("contrast", {"scale": 1.25}),             # x * scale
    ("gamma", {"gamma": 0.8}),                 # sign(x) * |x|^gamma
    ("normalize", {"mean": 0.5, "std": 2.0}),  # (x - mean) / std
)

_LANE_CHOICES = (1024, 512, 256, 128)   # lane-dense slab widths (multiples of 128)


def _sublane_quantum(dtype):
    # Sub-32-bit dtypes pack along sublanes: f32 -> 8, bf16 -> 16, int8/fp8 -> 32.
    return {4: 8, 2: 16, 1: 32}.get(jnp.dtype(dtype).itemsize, 8)


def _generation_params():
    """Generation-aware block / VMEM-limit sizing.

    v7x   : 64 MiB VMEM per TC, 2 TCs/chip -> 4 MiB blocks, 32 MiB limit, even grid.
    v5e/v6e: 128 MiB VMEM, 1 TC/chip        -> 8 MiB blocks, 64 MiB limit.
    """
    try:
        vmem_cap = pltpu.get_tpu_info().vmem_capacity_bytes
    except Exception:
        vmem_cap = 128 * 1024 * 1024
    if vmem_cap <= 64 * 1024 * 1024:
        return {"block_bytes": 4 << 20, "vmem_limit": 32 << 20, "num_cores": 2}
    return {"block_bytes": 8 << 20, "vmem_limit": 64 << 20, "num_cores": 1}


# ----------------------------------------------------------------------------
# Python-side constant folding of the sampled transform order.
# brightness/contrast/normalize are all affine (a*x + b); any adjacent run of
# them collapses into one fused multiply-add.  Division by std becomes a
# reciprocal multiply.  Result: tuple of ("affine", a, b) / ("gamma", g) ops.
# ----------------------------------------------------------------------------
def _fold_order(order):
    ops = []
    for idx in order:
        name, params = TRANSFORM_DEFS[idx]
        if name == "gamma":
            ops.append(("gamma", float(params["gamma"])))
            continue
        if name == "brightness":
            a, b = 1.0, float(params["shift"])
        elif name == "contrast":
            a, b = float(params["scale"]), 0.0
        elif name == "normalize":
            inv = 1.0 / float(params["std"])
            a, b = inv, -float(params["mean"]) * inv
        else:
            raise ValueError(f"unknown transform {name}")
        if ops and ops[-1][0] == "affine":
            _, a0, b0 = ops[-1]
            ops[-1] = ("affine", a * a0, a * b0 + b)   # a*(a0*x+b0)+b
        else:
            ops.append(("affine", a, b))
    return tuple(ops)


def _apply_ops(ops, x):
    """Apply the folded chain to an f32 array (used in-kernel and for tails)."""
    for op in ops:
        if op[0] == "affine":
            _, a, b = op
            x = x * jnp.float32(a) + jnp.float32(b)
        else:
            _, g = op
            # Sign-preserving gamma.  pow(|x|, g) goes to the EUP; the sign is
            # reattached with a single compare + negate + select instead of
            # jnp.sign(x)*... (which costs extra compares/selects + a multiply).
            mag = jnp.power(jnp.abs(x), jnp.float32(g))
            x = jnp.where(x < 0, -mag, mag)
    return x


# ----------------------------------------------------------------------------
# Pallas kernel: applies the folded transform chain on one VMEM block.
# ----------------------------------------------------------------------------
def _make_pipeline_kernel(ops):
    def kernel(x_ref, o_ref):
        x = x_ref[...].astype(jnp.float32)
        o_ref[...] = _apply_ops(ops, x).astype(o_ref.dtype)

    return kernel


def _choose_lane(n):
    """Widest lane-dense slab width that divides n (no tail needed)."""
    for lane in _LANE_CHOICES:
        if n % lane == 0:
            return lane
    return 128   # odd size: lane-divisible prefix + tiny jnp tail


# ----------------------------------------------------------------------------
# Compiled pipeline, cached per (folded ops, shape, dtype).  Only 24 transform
# permutations exist, so in steady state no call re-traces or re-compiles.
# ----------------------------------------------------------------------------
@functools.lru_cache(maxsize=None)
def _build_pipeline(ops, shape, dtype_name):
    dtype = jnp.dtype(dtype_name)
    itemsize = dtype.itemsize
    sublane = _sublane_quantum(dtype)
    gen = _generation_params()

    n = math.prod(shape)
    lane = _choose_lane(n)
    rows = n // lane                 # lane-divisible prefix rows
    prefix_n = rows * lane
    tail = n - prefix_n              # < lane elements (0 for typical NCHW sizes)

    if rows == 0:
        # Entire tensor is smaller than one lane row: pure jnp (elementwise).
        @jax.jit
        def run(x):
            flat = x.reshape(-1).astype(jnp.float32)
            return _apply_ops(ops, flat).astype(dtype).reshape(shape)

        return run

    # --- block sizing ---------------------------------------------------
    # Target ~block_bytes per block, but guarantee at least min_blocks grid
    # steps (even multiple of the TC count on v7x) so megacore sharding and
    # DMA/compute overlap actually kick in for medium arrays.
    min_blocks = 2 * gen["num_cores"]
    total_bytes = rows * lane * itemsize
    blocks = max(min_blocks, pl.cdiv(total_bytes, gen["block_bytes"]))
    if gen["num_cores"] > 1:
        blocks = pl.cdiv(blocks, gen["num_cores"]) * gen["num_cores"]
    tile_rows = pl.cdiv(rows, blocks)
    tile_rows = pl.cdiv(tile_rows, sublane) * sublane   # sublane-quantum rows
    if tile_rows >= rows:
        tile_rows = rows                                # full-dim block (grid=1)
    grid = (pl.cdiv(rows, tile_rows),)

    kernel = _make_pipeline_kernel(ops)

    call = pl.pallas_call(
        kernel,
        out_shape=jax.ShapeDtypeStruct((rows, lane), dtype),
        grid=grid,
        in_specs=[pl.BlockSpec((tile_rows, lane), lambda i: (i, 0))],
        out_specs=pl.BlockSpec((tile_rows, lane), lambda i: (i, 0)),
        compiler_params=pltpu.CompilerParams(
            dimension_semantics=("parallel",),        # shards across v7x's 2 TCs
            vmem_limit_bytes=gen["vmem_limit"],       # 4 x block fits w/ headroom
        ),
    )

    @jax.jit
    def run(x):
        flat = x.reshape(-1)
        body_out = call(flat[:prefix_n].reshape(rows, lane)).reshape(-1)
        if tail:
            # Rare fallback (element count not a multiple of 128): the <128
            # element tail is handled with plain jnp -- no full-array pad/copy.
            tail_out = _apply_ops(ops, flat[prefix_n:].astype(jnp.float32))
            body_out = jnp.concatenate([body_out, tail_out.astype(dtype)])
        return body_out.reshape(shape)

    return run


def augmentation_pipeline(x):
    """Apply the transforms in a random order (like the PyTorch module).

    x: array in NCHW layout (any float dtype; computed in f32 internally).
    """
    n_t = len(TRANSFORM_DEFS)
    order = tuple(random.sample(range(n_t), k=n_t))   # mirrors random.sample
    ops = _fold_order(order)
    run = _build_pipeline(ops, tuple(x.shape), jnp.dtype(x.dtype).name)
    return run(x)


# ----------------------------------------------------------------------------
# Pure-JAX reference (same permutation, unfolded transforms) for a
# correctness check.
# ----------------------------------------------------------------------------
def _reference(x, order):
    y = x.astype(jnp.float32)
    for idx in order:
        name, params = TRANSFORM_DEFS[idx]
        if name == "brightness":
            y = y + params["shift"]
        elif name == "contrast":
            y = y * params["scale"]
        elif name == "gamma":
            y = jnp.sign(y) * jnp.abs(y) ** params["gamma"]
        elif name == "normalize":
            y = (y - params["mean"]) / params["std"]
    return y.astype(x.dtype)


if __name__ == "__main__":
    # Deterministic transform-order randomization (mirrors random.sample in
    # the PyTorch forward) and deterministic input.
    random.seed(0)
    key = jax.random.PRNGKey(0)
    x = jax.random.normal(key, (2, 4, 16, 16), dtype=jnp.float32)  # NCHW

    # Run the fused Pallas pipeline once.
    state = random.getstate()
    y = augmentation_pipeline(x)
    y = jax.block_until_ready(y)

    # Re-derive the same permutation for the reference check.
    random.setstate(state)
    n_t = len(TRANSFORM_DEFS)
    order = random.sample(range(n_t), k=n_t)
    y_ref = _reference(x, order)

    assert y.shape == x.shape and y.dtype == x.dtype
    assert jnp.allclose(y, y_ref, atol=1e-5, rtol=1e-5)

    # Second call with a new permutation exercises the per-permutation cache.
    state = random.getstate()
    y2 = jax.block_until_ready(augmentation_pipeline(x))
    random.setstate(state)
    order2 = random.sample(range(n_t), k=n_t)
    assert jnp.allclose(y2, _reference(x, order2), atol=1e-5, rtol=1e-5)

    print("KERNEL_OK")
</pallas_src>

<mosaic_0001>
module attributes {stable_mosaic.version = 11 : i64} {
  func.func @kernel(%arg0: i32, %arg1: memref<2x1024xf32, #tpu.memory_space<vmem>>, %arg2: memref<2x1024xf32, #tpu.memory_space<vmem>>) attributes {dimension_semantics = [#tpu.dimension_semantics<parallel>], iteration_bounds = array<i64: 1>, scalar_prefetch = 0 : i64, scratch_operands = 0 : i64, tpu.core_type = #tpu.core_type<tc>, window_params = [{transform_indices = @transform_0, window_bounds = array<i64: 2, 1024>}, {transform_indices = @transform_1, window_bounds = array<i64: 2, 1024>}]} {
    %c0 = arith.constant 0 : index
    %c0_0 = arith.constant 0 : index
    %0 = vector.load %arg1[%c0, %c0_0] : memref<2x1024xf32, #tpu.memory_space<vmem>>, vector<2x1024xf32>
    %cst = arith.constant 6.250000e-01 : f32
    %1 = vector.broadcast %cst : f32 to vector<2x1024xf32>
    %2 = arith.mulf %0, %1 : vector<2x1024xf32>
    %cst_1 = arith.constant -2.125000e-01 : f32
    %3 = vector.broadcast %cst_1 : f32 to vector<2x1024xf32>
    %4 = arith.addf %2, %3 : vector<2x1024xf32>
    %5 = math.absf %4 : vector<2x1024xf32>
    %cst_2 = arith.constant 8.000000e-01 : f32
    %6 = vector.broadcast %cst_2 : f32 to vector<2x1024xf32>
    %7 = math.powf %5, %6 : vector<2x1024xf32>
    %cst_3 = arith.constant 0.000000e+00 : f32
    %8 = vector.broadcast %cst_3 : f32 to vector<2x1024xf32>
    %9 = arith.cmpf olt, %4, %8 : vector<2x1024xf32>
    %cst_4 = arith.constant 0.000000e+00 : f32
    %10 = vector.broadcast %cst_4 : f32 to vector<2x1024xf32>
    %11 = arith.subf %10, %7 : vector<2x1024xf32>
    %12 = arith.select %9, %11, %7 : vector<2x1024xi1>, vector<2x1024xf32>
    %c0_5 = arith.constant 0 : index
    %c0_6 = arith.constant 0 : index
    %13 = vector.load %arg2[%c0_5, %c0_6] : memref<2x1024xf32, #tpu.memory_space<vmem>>, vector<2x1024xf32>
    tpu.vector_store %arg2[%c0_5, %c0_6], %12 {strides = array<i32>} : memref<2x1024xf32, #tpu.memory_space<vmem>>, vector<2x1024xf32>,
    return
  }
  func.func @transform_0(%arg0: i32) -> (i32, i32) {
    %c0_i32 = arith.constant 0 : i32
    %c0_i32_0 = arith.constant 0 : i32
    return %arg0, %c0_i32 : i32, i32
  }
  func.func @transform_1(%arg0: i32) -> (i32, i32) {
    %c0_i32 = arith.constant 0 : i32
    %c0_i32_0 = arith.constant 0 : i32
    return %arg0, %c0_i32 : i32, i32
  }
}

</mosaic_0001>

<llo_original>
// kernel: run.1
$region0: #{run.1}
  #allocation0 [shape = 'u32[]', space=smem, size = 0x4, offset = 0x4, fixed_abs, tag = 'smem constant byte address 0x4 - core index']
  #allocation1 [shape = 'u32[144,128]{1,0:T(1,128)}', space=vmem, size = 0x12000, scoped, tag = 'internal scratch']
  %s0 = inlined_call_operand.hbm [shape: f32[2,1024], index: 0, kind: input, shape index: {}]
  %s1 = inlined_call_operand.hbm [shape: f32[2,1024], index: 1, kind: output, shape index: {}]
  %s2 = sld [smem:[#allocation0]]
  $region18: #{run.1} parent=0
    _
  %s4 = ssub.s32 1, %s2
  %s5 = scalar_select 0, %s4, %s2
  $region1: #{run.1} parent=0
    #allocation2 [shape = 'u8[8192]{0}', space=vmem, size = 0x2000, scoped, tag = 'input window, operand 0, single buffered']
    #allocation3 [shape = 's32[1]{0}', space=sflag, size = 0x4, scoped, tag = 'scoped memory for run.1']
    #allocation4 [shape = 's32[1]{0}', space=sflag, size = 0x4, scoped, tag = 'scoped memory for run.1']
    #allocation5 [shape = 'u8[8192]{0}', space=vmem, size = 0x2000, scoped, tag = 'output window, operand 0, single buffered']
    %6 = vsyncpa [#allocation3], 0
    %7 = vsyncpa [#allocation4], 0
    // Predicated region
    $region2: #{run.1} parent=1 // pred_check
      _
    $region3: #{run.1} parent=1 // pred_check_branch
      %9 = sbr.rel (0) target = $region5
    $region4: #{run.1} parent=1 // pred_region
      %s11 = ssub.s32 256, 256
      %12 = vsyncadd [#allocation3], %s11
      %s14 = sshll.u32 [#allocation2], 4
      %s15 = int_to_ptr.vmem [resolvable:$true] %s14
      %17 = dma.hbm_to_vmem [thread:$0]  %s0, 256, %s15, [#allocation3]
    $region5: #{run.1} parent=1 // pred_fallthru
      _
    // Predicated region
    $region6: #{run.1} parent=1 // pred_check
      _
    $region7: #{run.1} parent=1 // pred_check_branch
      %19 = sbr.rel (0) target = $region9
    $region8: #{run.1} parent=1 // pred_region
      %20 = dma.done [#allocation3], 256
    $region9: #{run.1} parent=1 // pred_fallthru
      _
    %v21 = vld [vmem:[#allocation2] sm:$0xff]
    %v22 = vld [vmem:[#allocation2 + $0x8] sm:$0xff]
    %v23 = vmul.f32 %v21, 0.625
    %v24 = vmul.f32 %v22, 0.625
    %v25 = vadd.f32 %v23, -0.2125
    %v26 = vadd.f32 %v24, -0.2125
    %v27 = vand.u32 2147483647, %v25
    %v28 = vand.u32 2147483647, %v26
    %v29 = vpow.f32 %v27, 0.8
    %v30 = vpow.f32 %v28, 0.8
    %vm31 = vcmp.lt.f32.partialorder %v25, 0.0
    %vm32 = vcmp.lt.f32.partialorder %v26, 0.0
    %v33 = vsub.f32 0.0, %v29
    %v34 = vsub.f32 0.0, %v30
    %v35 = vsel %vm31, %v33, %v29
    %v36 = vsel %vm32, %v34, %v30
    %37 = vst [vmem:[#allocation5] sm:$0xff] %v35
    %38 = vst [vmem:[#allocation5 + $0x8] sm:$0xff] %v36
    // Predicated region
    $region10: #{run.1} parent=1 // pred_check
      _
    $region11: #{run.1} parent=1 // pred_check_branch
      %40 = sbr.rel (0) target = $region13
    $region12: #{run.1} parent=1 // pred_region
      %s42 = ssub.s32 256, 256
      %43 = vsyncadd [#allocation4], %s42
      %s45 = sshll.u32 [#allocation5], 4
      %s46 = int_to_ptr.vmem [resolvable:$true] %s45
      %48 = dma.vmem_to_hbm [thread:$0]  %s46, 256, %s1, [#allocation4]
    $region13: #{run.1} parent=1 // pred_fallthru
      _
    // Predicated region
    $region14: #{run.1} parent=1 // pred_check
      _
    $region15: #{run.1} parent=1 // pred_check_branch
      %50 = sbr.rel (0) target = $region17
    $region16: #{run.1} parent=1 // pred_region
      %51 = dma.done [#allocation4], 256
    $region17: #{run.1} parent=1 // pred_fallthru
      _
    %52 = vsyncpa [#allocation3], 1
    %53 = vsyncpa [#allocation4], 1

</llo_original>
